<compile_context>
chip_gen: v7x
topology: tpu7x:2x2x1
jax: 0.10.0
libtpu: 0.0.40
codegen_flags: <defaults>
</compile_context>

<pallas_src>
import functools

import jax
import jax.numpy as jnp
from jax.experimental import pallas as pl
from jax.experimental.pallas import tpu as pltpu


def _round_up(x, m):
    return ((x + m - 1) // m) * m


# --------------------------------------------------------------------------
# support = act(features @ W)   (small matmul, row-tiled over nodes)
# --------------------------------------------------------------------------
def _support_kernel(feat_ref, w_ref, sup_ref, *, active):
    s = jnp.dot(feat_ref[...], w_ref[...], preferred_element_type=jnp.float32)
    if active:
        s = jnp.tanh(s)
    sup_ref[...] = s.astype(sup_ref.dtype)


def _compute_support(features, weight, active, out_dtype, tm):
    n_pad, in_f = features.shape
    f_pad = weight.shape[1]
    kernel = functools.partial(_support_kernel, active=active)
    flops = 2 * n_pad * in_f * f_pad
    bytes_accessed = (
        features.size * features.dtype.itemsize
        + weight.size * weight.dtype.itemsize
        + n_pad * f_pad * jnp.dtype(out_dtype).itemsize
    )
    return pl.pallas_call(
        kernel,
        out_shape=jax.ShapeDtypeStruct((n_pad, f_pad), out_dtype),
        grid_spec=pltpu.PrefetchScalarGridSpec(
            num_scalar_prefetch=0,
            grid=(n_pad // tm,),
            in_specs=[
                pl.BlockSpec((tm, in_f), lambda i: (i, 0)),
                pl.BlockSpec((in_f, f_pad), lambda i: (0, 0)),
            ],
            out_specs=pl.BlockSpec((tm, f_pad), lambda i: (i, 0)),
        ),
        compiler_params=pltpu.CompilerParams(
            dimension_semantics=("parallel",),
        ),
        cost_estimate=pl.CostEstimate(
            flops=flops,
            transcendentals=(n_pad * f_pad) if active else 0,
            bytes_accessed=bytes_accessed,
        ),
    )(features, weight)


# --------------------------------------------------------------------------
# Row-tiled, K-accumulated  out = adj @ b   (used for both big matmuls)
# --------------------------------------------------------------------------
def _adj_matmul_kernel(a_ref, b_ref, o_ref, acc_ref):
    @pl.when(pl.program_id(1) == 0)
    def _():
        acc_ref[...] = jnp.zeros_like(acc_ref)

    acc_ref[...] += jnp.dot(
        a_ref[...], b_ref[...], preferred_element_type=jnp.float32
    )

    @pl.when(pl.program_id(1) == pl.num_programs(1) - 1)
    def _():
        o_ref[...] = acc_ref[...].astype(o_ref.dtype)


def _adj_matmul(adj, b, out_dtype, tm, tk):
    n_pad = adj.shape[0]
    f_pad = b.shape[1]
    grid = (n_pad // tm, n_pad // tk)
    flops = 2 * n_pad * n_pad * f_pad
    bytes_accessed = (
        adj.size * adj.dtype.itemsize
        + grid[0] * b.size * b.dtype.itemsize
        + n_pad * f_pad * jnp.dtype(out_dtype).itemsize
    )
    return pl.pallas_call(
        _adj_matmul_kernel,
        out_shape=jax.ShapeDtypeStruct((n_pad, f_pad), out_dtype),
        grid_spec=pltpu.PrefetchScalarGridSpec(
            num_scalar_prefetch=0,
            grid=grid,
            in_specs=[
                pl.BlockSpec((tm, tk), lambda i, k: (i, k)),
                pl.BlockSpec((tk, f_pad), lambda i, k: (k, 0)),
            ],
            out_specs=pl.BlockSpec((tm, f_pad), lambda i, k: (i, 0)),
            scratch_shapes=[pltpu.VMEM((tm, f_pad), jnp.float32)],
        ),
        compiler_params=pltpu.CompilerParams(
            dimension_semantics=("parallel", "arbitrary"),
            vmem_limit_bytes=32 * 1024 * 1024,
        ),
        cost_estimate=pl.CostEstimate(
            flops=flops, transcendentals=0, bytes_accessed=bytes_accessed
        ),
    )(adj, b)


# --------------------------------------------------------------------------
# Public wrapper
# --------------------------------------------------------------------------
def gnn_layer_forward(features, adj, weight, active=False,
                      compute_dtype=jnp.bfloat16):
    """Pallas implementation of GNNLayer.forward.

    features: (N, in_features) f32
    adj:      (N, N) f32 dense adjacency (torch.spmm reproduced densely)
    weight:   (in_features, out_features) f32
    compute_dtype: operand dtype of the two big adj matmuls (bf16 default;
                   accumulation is always f32).
    returns:  (output, az), each (N, out_features), dtype of `features`.
    """
    n, in_f = features.shape
    out_f = weight.shape[1]

    # Lane-dense feature dim; tile sizes that fit comfortably in VMEM on
    # v5e / v6e / v7x (<= ~1.5 MiB of double-buffered adj tiles even in f32).
    f_pad = _round_up(out_f, 128)
    n_pad0 = _round_up(n, 128)
    if n_pad0 <= 512:
        tm = tk = n_pad = n_pad0          # single tile per axis, tiny problem
    else:
        tm, tk = 256, 512                  # 256-aligned M for the v6e/v7x MXU
        n_pad = _round_up(n, tk)

    f32 = jnp.float32
    feat_p = jnp.pad(features.astype(f32), ((0, n_pad - n), (0, 0)))
    w_p = jnp.pad(weight.astype(f32), ((0, 0), (0, f_pad - out_f)))
    # Cast adj to the compute dtype ONCE and reuse it for both passes.
    adj_p = jnp.pad(adj.astype(compute_dtype),
                    ((0, n_pad - n), (0, n_pad - n)))

    # support = act(features @ W), kept as a compact (N_pad, F_pad) operand.
    support = _compute_support(feat_p, w_p, active, compute_dtype, tm)

    # Pass 1: output = adj @ support      (f32 result returned to caller)
    output_p = _adj_matmul(adj_p, support, jnp.float32, tm, tk)
    # Pass 2: az = adj @ output           (operand re-cast to compute dtype)
    az_p = _adj_matmul(adj_p, output_p.astype(compute_dtype),
                       jnp.float32, tm, tk)

    output = output_p[:n, :out_f].astype(features.dtype)
    az = az_p[:n, :out_f].astype(features.dtype)
    return output, az


def _reference(features, adj, weight, active=False):
    support = features @ weight
    if active:
        support = jnp.tanh(support)
    output = adj @ support
    az = adj @ output
    return output, az


if __name__ == "__main__":
    key = jax.random.PRNGKey(0)
    k_feat, k_adj, k_w = jax.random.split(key, 3)

    N = 64            # number of nodes
    IN_FEATURES = 32
    OUT_FEATURES = 16

    features = jax.random.normal(k_feat, (N, IN_FEATURES), dtype=jnp.float32)

    # Simple symmetric, row-normalized dense "adjacency".
    raw = jax.random.uniform(k_adj, (N, N), dtype=jnp.float32)
    adj = (raw + raw.T) * 0.5
    adj = adj / jnp.sum(adj, axis=1, keepdims=True)

    # Xavier-uniform init for weight (deterministic via PRNGKey(0) split).
    bound = (6.0 / (IN_FEATURES + OUT_FEATURES)) ** 0.5
    weight = jax.random.uniform(
        k_w, (IN_FEATURES, OUT_FEATURES), dtype=jnp.float32,
        minval=-bound, maxval=bound,
    )

    # f32 compute path: tight check of the forward semantics.
    out_act32, az_act32 = gnn_layer_forward(
        features, adj, weight, active=True, compute_dtype=jnp.float32)
    out_lin32, az_lin32 = gnn_layer_forward(
        features, adj, weight, active=False, compute_dtype=jnp.float32)
    # bf16 compute path (perf default): looser tolerance.
    out_bf16, az_bf16 = gnn_layer_forward(features, adj, weight, active=True)

    jax.block_until_ready(
        (out_act32, az_act32, out_lin32, az_lin32, out_bf16, az_bf16))

    ref_out_act, ref_az_act = _reference(features, adj, weight, active=True)
    ref_out_lin, ref_az_lin = _reference(features, adj, weight, active=False)

    assert out_act32.shape == (N, OUT_FEATURES)
    assert az_act32.shape == (N, OUT_FEATURES)

    assert jnp.allclose(out_act32, ref_out_act, atol=1e-4, rtol=1e-4)
    assert jnp.allclose(az_act32, ref_az_act, atol=1e-4, rtol=1e-4)
    assert jnp.allclose(out_lin32, ref_out_lin, atol=1e-4, rtol=1e-4)
    assert jnp.allclose(az_lin32, ref_az_lin, atol=1e-4, rtol=1e-4)

    assert jnp.allclose(out_bf16, ref_out_act, atol=2e-2, rtol=2e-2)
    assert jnp.allclose(az_bf16, ref_az_act, atol=2e-2, rtol=2e-2)

    print("KERNEL_OK")
</pallas_src>

<mosaic_0001>
module attributes {stable_mosaic.version = 11 : i64} {
  func.func @_support_kernel(%arg0: i32, %arg1: memref<128x32xf32, #tpu.memory_space<vmem>>, %arg2: memref<32x128xf32, #tpu.memory_space<vmem>>, %arg3: memref<128x128xf32, #tpu.memory_space<vmem>>) attributes {dimension_semantics = [#tpu.dimension_semantics<parallel>], iteration_bounds = array<i64: 1>, scalar_prefetch = 0 : i64, scratch_operands = 0 : i64, tpu.core_type = #tpu.core_type<tc>, window_params = [{transform_indices = @transform_0, window_bounds = array<i64: 128, 32>}, {pipeline_mode = #tpu.pipeline_mode<synchronous>, transform_indices = @transform_1, window_bounds = array<i64: 32, 128>}, {transform_indices = @transform_2, window_bounds = array<i64: 128, 128>}]} {
    %c0 = arith.constant 0 : index
    %c0_0 = arith.constant 0 : index
    %0 = vector.load %arg1[%c0, %c0_0] : memref<128x32xf32, #tpu.memory_space<vmem>>, vector<128x32xf32>
    %c0_1 = arith.constant 0 : index
    %c0_2 = arith.constant 0 : index
    %1 = vector.load %arg2[%c0_1, %c0_2] : memref<32x128xf32, #tpu.memory_space<vmem>>, vector<32x128xf32>
    %cst = arith.constant dense<0.000000e+00> : vector<128x128xf32>
    %2 = tpu.matmul %0, %1, %cst {dimension_numbers = #tpu.dot_dimension_numbers<[1], [0], [0], [1], [0, 0, 1, 1], [], []>} : vector<128x32xf32>, vector<32x128xf32>, vector<128x128xf32> -> vector<128x128xf32>
    %3 = math.tanh %2 : vector<128x128xf32>
    %c0_3 = arith.constant 0 : index
    %c0_4 = arith.constant 0 : index
    %4 = vector.load %arg3[%c0_3, %c0_4] : memref<128x128xf32, #tpu.memory_space<vmem>>, vector<128x128xf32>
    tpu.vector_store %arg3[%c0_3, %c0_4], %3 {strides = array<i32>} : memref<128x128xf32, #tpu.memory_space<vmem>>, vector<128x128xf32>,
    return
  }
  func.func @transform_0(%arg0: i32) -> (i32, i32) {
    %c0_i32 = arith.constant 0 : i32
    %c0_i32_0 = arith.constant 0 : i32
    return %arg0, %c0_i32 : i32, i32
  }
  func.func @transform_1(%arg0: i32) -> (i32, i32) {
    %c0_i32 = arith.constant 0 : i32
    %c0_i32_0 = arith.constant 0 : i32
    %c0_i32_1 = arith.constant 0 : i32
    return %c0_i32, %c0_i32_0 : i32, i32
  }
  func.func @transform_2(%arg0: i32) -> (i32, i32) {
    %c0_i32 = arith.constant 0 : i32
    %c0_i32_0 = arith.constant 0 : i32
    return %arg0, %c0_i32 : i32, i32
  }
}

</mosaic_0001>

<llo_original>
// kernel: tpu_custom_call.1
$region0: #{tpu_custom_call.1}
  #allocation0 [shape = 'u32[]', space=smem, size = 0x4, offset = 0x4, fixed_abs, tag = 'smem constant byte address 0x4 - core index']
  #allocation1 [shape = 'u32[144,128]{1,0:T(1,128)}', space=vmem, size = 0x12000, scoped, tag = 'internal scratch']
  %s0 = inlined_call_operand.vmem [shape: f32[128,32], index: 0, kind: input, shape index: {}]
  %s1 = inlined_call_operand.vmem [shape: f32[32,128], index: 1, kind: input, shape index: {}]
  %s2 = inlined_call_operand.hbm [shape: f32[128,128], index: 2, kind: output, shape index: {}]
  %s3 = sld [smem:[#allocation0]]
  $region18: #{tpu_custom_call.1} parent=0
    _
  %s5 = ssub.s32 1, %s3
  %s6 = scalar_select 0, %s5, %s3
  $region1: #{tpu_custom_call.1} parent=0
    #allocation2 [shape = 'u8[65536]{0}', space=vmem, size = 0x10000, scoped, tag = 'output window, operand 0, single buffered']
    #allocation3 [shape = 's32[1]{0}', space=sflag, size = 0x4, scoped, tag = 'scoped memory for tpu_custom_call.1']
    %7 = vsyncpa [#allocation3], 0
    // Predicated region
    $region2: #{tpu_custom_call.1} parent=1 // pred_check
      _
    $region3: #{tpu_custom_call.1} parent=1 // pred_check_branch
      %9 = sbr.rel (0) target = $region5
    $region4: #{tpu_custom_call.1} parent=1 // pred_region
      _
    $region5: #{tpu_custom_call.1} parent=1 // pred_fallthru
      _
    // Predicated region
    $region6: #{tpu_custom_call.1} parent=1 // pred_check
      _
    $region7: #{tpu_custom_call.1} parent=1 // pred_check_branch
      %11 = sbr.rel (0) target = $region9
    $region8: #{tpu_custom_call.1} parent=1 // pred_region
      _
    $region9: #{tpu_custom_call.1} parent=1 // pred_fallthru
      _
    %v12 = vld [vmem:[%s0] sm:$0xff]
    %v13 = vld [vmem:[%s0 + $0x8] sm:$0xff]
    %v14 = vld [vmem:[%s0 + $0x10] sm:$0xff]
    %v15 = vld [vmem:[%s0 + $0x18] sm:$0xff]
    %v16 = vld [vmem:[%s0 + $0x20] sm:$0xff]
    %v17 = vld [vmem:[%s0 + $0x28] sm:$0xff]
    %v18 = vld [vmem:[%s0 + $0x30] sm:$0xff]
    %v19 = vld [vmem:[%s0 + $0x38] sm:$0xff]
    %v20 = vld [vmem:[%s0 + $0x40] sm:$0xff]
    %v21 = vld [vmem:[%s0 + $0x48] sm:$0xff]
    %v22 = vld [vmem:[%s0 + $0x50] sm:$0xff]
    %v23 = vld [vmem:[%s0 + $0x58] sm:$0xff]
    %v24 = vld [vmem:[%s0 + $0x60] sm:$0xff]
    %v25 = vld [vmem:[%s0 + $0x68] sm:$0xff]
    %v26 = vld [vmem:[%s0 + $0x70] sm:$0xff]
    %v27 = vld [vmem:[%s0 + $0x78] sm:$0xff]
    %v28 = vld [vmem:[%s1] sm:$0xff]
    %v29 = vld [vmem:[%s1 + $0x8] sm:$0xff]
    %v30 = vld [vmem:[%s1 + $0x10] sm:$0xff]
    %v31 = vld [vmem:[%s1 + $0x18] sm:$0xff]
    %vm32 = vcmask 261120
    %v34 = vsel %vm32, %v12, 0
    %v37 = vsel %vm32, %v13, 0
    %v40 = vsel %vm32, %v14, 0
    %v43 = vsel %vm32, %v15, 0
    %v46 = vsel %vm32, %v16, 0
    %v49 = vsel %vm32, %v17, 0
    %v52 = vsel %vm32, %v18, 0
    %v55 = vsel %vm32, %v19, 0
    %v58 = vsel %vm32, %v20, 0
    %v61 = vsel %vm32, %v21, 0
    %v64 = vsel %vm32, %v22, 0
    %v67 = vsel %vm32, %v23, 0
    %v70 = vsel %vm32, %v24, 0
    %v73 = vsel %vm32, %v25, 0
    %v76 = vsel %vm32, %v26, 0
    %v79 = vsel %vm32, %v27, 0
    %81 = vmatprep.subr.mxu0 0.0
    %82 = vmatpush1.msra.mxu0 %v28
    %83 = vmatprep.subr.mxu0 0.0
    %84 = vmatpush1.msra.mxu0 %v29
    %85 = vmatprep.subr.mxu0 0.0
    %86 = vmatpush1.msra.mxu0 %v30
    %87 = vmatprep.subr.mxu0 0.0
    %88 = vmatpush1.msra.mxu0 %v31
    %89 = vmatprep.subr.mxu0 0.0
    %90 = vmatpush1.msra.mxu0 0.0
    %91 = vmatprep.subr.mxu0 0.0
    %92 = vmatpush1.msra.mxu0 0.0
    %93 = vmatprep.subr.mxu0 0.0
    %94 = vmatpush1.msra.mxu0 0.0
    %95 = vmatprep.subr.mxu0 0.0
    %96 = vmatpush1.msra.mxu0 0.0
    %97 = vmatprep.subr.mxu0 0.0
    %98 = vmatpush1.msra.mxu0 0.0
    %99 = vmatprep.subr.mxu0 0.0
    %100 = vmatpush1.msra.mxu0 0.0
    %101 = vmatprep.subr.mxu0 0.0
    %102 = vmatpush1.msra.mxu0 0.0
    %103 = vmatprep.subr.mxu0 0.0
    %104 = vmatpush1.msra.mxu0 0.0
    %105 = vmatprep.subr.mxu0 0.0
    %106 = vmatpush1.msra.mxu0 0.0
    %107 = vmatprep.subr.mxu0 0.0
    %108 = vmatpush1.msra.mxu0 0.0
    %109 = vmatprep.subr.mxu0 0.0
    %110 = vmatpush1.msra.mxu0 0.0
    %111 = vmatprep.subr.mxu0 0.0
    %112 = vmatpush1.msra.mxu0 0.0
    %113 = vmatprep.subr.mxu0 0.0
    %114 = vmatpush1.msra.mxu0 0.0
    %115 = vmatprep.subr.mxu0 0.0
    %116 = vmatpush1.msra.mxu0 0.0
    %117 = vmatprep.subr.mxu0 0.0
    %118 = vmatpush1.msra.mxu0 0.0
    %119 = vmatprep.subr.mxu0 0.0
    %120 = vmatpush1.msra.mxu0 0.0
    %121 = vmatprep.subr.mxu0 0.0
    %122 = vmatpush1.msra.mxu0 0.0
    %123 = vmatprep.subr.mxu0 0.0
    %124 = vmatpush1.msra.mxu0 0.0
    %125 = vmatprep.subr.mxu0 0.0
    %126 = vmatpush1.msra.mxu0 0.0
    %127 = vmatprep.subr.mxu0 0.0
    %128 = vmatpush1.msra.mxu0 0.0
    %129 = vmatprep.subr.mxu0 0.0
    %130 = vmatpush1.msra.mxu0 0.0
    %131 = vmatprep.subr.mxu0 0.0
    %132 = vmatpush1.msra.mxu0 0.0
    %133 = vmatprep.subr.mxu0 0.0
    %134 = vmatpush1.msra.mxu0 0.0
    %135 = vmatprep.subr.mxu0 0.0
    %136 = vmatpush1.msra.mxu0 0.0
    %137 = vmatprep.subr.mxu0 0.0
    %138 = vmatpush1.msra.mxu0 0.0
    %139 = vmatprep.subr.mxu0 0.0
    %140 = vmatpush1.msra.mxu0 0.0
    %141 = vmatprep.subr.mxu0 0.0
    %142 = vmatpush1.msra.mxu0 0.0
    %143 = vmatprep.subr.mxu0 0.0
    %144 = vmatpush1.msra.mxu0 0.0
    %145 = vmatprep.mubr.f32.mxu0 0.0
    %146 = vmatmul.mubr.f32.gmra.mrb[0].mxu0 %v34
    %v147 = vpop.f32.mrb[0].mxu0
    %v148 = vadd.f32 0.0, %v147
    %v149 = vpop.f32.mrb[0].mxu0
    %150 = vmatprep.mubr.f32.mxu0 0.0
    %151 = vmatmul.mubr.f32.gmra.mrb[0].mxu0 %v37
    %v152 = vpop.f32.mrb[0].mxu0
    %v153 = vadd.f32 0.0, %v152
    %v154 = vpop.f32.mrb[0].mxu0
    %155 = vmatprep.mubr.f32.mxu0 0.0
    %156 = vmatmul.mubr.f32.gmra.mrb[0].mxu0 %v40
    %v157 = vpop.f32.mrb[0].mxu0
    %v158 = vadd.f32 0.0, %v157
    %v159 = vpop.f32.mrb[0].mxu0
    %160 = vmatprep.mubr.f32.mxu0 0.0
    %161 = vmatmul.mubr.f32.gmra.mrb[0].mxu0 %v43
    %v162 = vpop.f32.mrb[0].mxu0
    %v163 = vadd.f32 0.0, %v162
    %v164 = vpop.f32.mrb[0].mxu0
    %165 = vmatprep.mubr.f32.mxu0 0.0
    %166 = vmatmul.mubr.f32.gmra.mrb[0].mxu0 %v46
    %v167 = vpop.f32.mrb[0].mxu0
    %v168 = vadd.f32 0.0, %v167
    %v169 = vpop.f32.mrb[0].mxu0
    %170 = vmatprep.mubr.f32.mxu0 0.0
    %171 = vmatmul.mubr.f32.gmra.mrb[0].mxu0 %v49
    %v172 = vpop.f32.mrb[0].mxu0
    %v173 = vadd.f32 0.0, %v172
    %v174 = vpop.f32.mrb[0].mxu0
    %175 = vmatprep.mubr.f32.mxu0 0.0
    %176 = vmatmul.mubr.f32.gmra.mrb[0].mxu0 %v52
    %v177 = vpop.f32.mrb[0].mxu0
    %v178 = vadd.f32 0.0, %v177
    %v179 = vpop.f32.mrb[0].mxu0
    %180 = vmatprep.mubr.f32.mxu0 0.0
    %181 = vmatmul.mubr.f32.gmra.mrb[0].mxu0 %v55
    %v182 = vpop.f32.mrb[0].mxu0
    %v183 = vadd.f32 0.0, %v182
    %v184 = vpop.f32.mrb[0].mxu0
    %185 = vmatprep.mubr.f32.mxu0 0.0
    %186 = vmatmul.mubr.f32.gmra.mrb[0].mxu0 %v58
    %v187 = vpop.f32.mrb[0].mxu0
    %v188 = vadd.f32 0.0, %v187
    %v189 = vpop.f32.mrb[0].mxu0
    %190 = vmatprep.mubr.f32.mxu0 0.0
    %191 = vmatmul.mubr.f32.gmra.mrb[0].mxu0 %v61
    %v192 = vpop.f32.mrb[0].mxu0
    %v193 = vadd.f32 0.0, %v192
    %v194 = vpop.f32.mrb[0].mxu0
    %195 = vmatprep.mubr.f32.mxu0 0.0
    %196 = vmatmul.mubr.f32.gmra.mrb[0].mxu0 %v64
    %v197 = vpop.f32.mrb[0].mxu0
    %v198 = vadd.f32 0.0, %v197
    %v199 = vpop.f32.mrb[0].mxu0
    %200 = vmatprep.mubr.f32.mxu0 0.0
    %201 = vmatmul.mubr.f32.gmra.mrb[0].mxu0 %v67
    %v202 = vpop.f32.mrb[0].mxu0
    %v203 = vadd.f32 0.0, %v202
    %v204 = vpop.f32.mrb[0].mxu0
    %205 = vmatprep.mubr.f32.mxu0 0.0
    %206 = vmatmul.mubr.f32.gmra.mrb[0].mxu0 %v70
    %v207 = vpop.f32.mrb[0].mxu0
    %v208 = vadd.f32 0.0, %v207
    %v209 = vpop.f32.mrb[0].mxu0
    %210 = vmatprep.mubr.f32.mxu0 0.0
    %211 = vmatmul.mubr.f32.gmra.mrb[0].mxu0 %v73
    %v212 = vpop.f32.mrb[0].mxu0
    %v213 = vadd.f32 0.0, %v212
    %v214 = vpop.f32.mrb[0].mxu0
    %215 = vmatprep.mubr.f32.mxu0 0.0
    %216 = vmatmul.mubr.f32.gmra.mrb[0].mxu0 %v76
    %v217 = vpop.f32.mrb[0].mxu0
    %v218 = vadd.f32 0.0, %v217
    %v219 = vpop.f32.mrb[0].mxu0
    %220 = vmatprep.mubr.f32.mxu0 0.0
    %221 = vmatmul.mubr.f32.gmra.mrb[0].mxu0 %v79
    %v222 = vpop.f32.mrb[0].mxu0
    %v223 = vadd.f32 0.0, %v222
    %v224 = vpop.f32.mrb[0].mxu0
    %225 = vdwg.mxu0
    %v226 = vtanh.pop %v148
    %v227 = vtanh.pop %v153
    %v228 = vtanh.pop %v158
    %v229 = vtanh.pop %v163
    %v230 = vtanh.pop %v168
    %v231 = vtanh.pop %v173
    %v232 = vtanh.pop %v178
    %v233 = vtanh.pop %v183
    %v234 = vtanh.pop %v188
    %v235 = vtanh.pop %v193
    %v236 = vtanh.pop %v198
    %v237 = vtanh.pop %v203
    %v238 = vtanh.pop %v208
    %v239 = vtanh.pop %v213
    %v240 = vtanh.pop %v218
    %v241 = vtanh.pop %v223
    %242 = vst [vmem:[#allocation2] sm:$0xff] %v226
    %243 = vst [vmem:[#allocation2 + $0x8] sm:$0xff] %v227
    %244 = vst [vmem:[#allocation2 + $0x10] sm:$0xff] %v228
    %245 = vst [vmem:[#allocation2 + $0x18] sm:$0xff] %v229
    %246 = vst [vmem:[#allocation2 + $0x20] sm:$0xff] %v230
    %247 = vst [vmem:[#allocation2 + $0x28] sm:$0xff] %v231
    %248 = vst [vmem:[#allocation2 + $0x30] sm:$0xff] %v232
    %249 = vst [vmem:[#allocation2 + $0x38] sm:$0xff] %v233
    %250 = vst [vmem:[#allocation2 + $0x40] sm:$0xff] %v234
    %251 = vst [vmem:[#allocation2 + $0x48] sm:$0xff] %v235
    %252 = vst [vmem:[#allocation2 + $0x50] sm:$0xff] %v236
    %253 = vst [vmem:[#allocation2 + $0x58] sm:$0xff] %v237
    %254 = vst [vmem:[#allocation2 + $0x60] sm:$0xff] %v238
    %255 = vst [vmem:[#allocation2 + $0x68] sm:$0xff] %v239
    %256 = vst [vmem:[#allocation2 + $0x70] sm:$0xff] %v240
    %257 = vst [vmem:[#allocation2 + $0x78] sm:$0xff] %v241
    // Predicated region
    $region10: #{tpu_custom_call.1} parent=1 // pred_check
      _
    $region11: #{tpu_custom_call.1} parent=1 // pred_check_branch
      %259 = sbr.rel (0) target = $region13
    $region12: #{tpu_custom_call.1} parent=1 // pred_region
      %s261 = ssub.s32 2048, 2048
      %262 = vsyncadd [#allocation3], %s261
      %s263 = sshll.u32 [#allocation2], 4
      %s264 = int_to_ptr.vmem [resolvable:$true] %s263
      %269 = dma.vmem_to_hbm [thread:$0]  %s264, 2048, %s2, [#allocation3], 128, 128, 8
    $region13: #{tpu_custom_call.1} parent=1 // pred_fallthru
      _
    // Predicated region
    $region14: #{tpu_custom_call.1} parent=1 // pred_check
      _
    $region15: #{tpu_custom_call.1} parent=1 // pred_check_branch
      %271 = sbr.rel (0) target = $region17
    $region16: #{tpu_custom_call.1} parent=1 // pred_region
      %272 = dma.done [#allocation3], 2048
    $region17: #{tpu_custom_call.1} parent=1 // pred_fallthru
      _
    %273 = vsyncpa [#allocation3], 1

</llo_original>
